<compile_context>
chip_gen: v7x
topology: tpu7x:2x2x1
jax: 0.10.0
libtpu: 0.0.40
codegen_flags: <defaults>
</compile_context>

<pallas_src>
import math

import jax
import jax.numpy as jnp
from jax import lax
from jax.experimental import pallas as pl
from jax.experimental.pallas import tpu as pltpu


LANE = 128        # lane width / feature padding
TN_PREF = 256     # preferred node (output-row) tile
TK_PREF = 512     # preferred neighbor (contraction) tile


def _round_up(v, m):
    return (v + m - 1) // m * m


def _pick_tile(n, pref):
    """Largest 128-multiple <= pref that divides n (n is a multiple of 128)."""
    t = pref
    while t > LANE and n % t != 0:
        t //= 2
    return t


def _vmem_limit_bytes():
    # Re-derived per generation: <= 3/4 of physical VMEM, capped at 96 MiB
    # (v5e/v6e: 128 MiB phys -> 96 MiB; v7x: 64 MiB phys -> 48 MiB).
    try:
        cap = pltpu.get_tpu_info().vmem_capacity_bytes
        return int(min(cap * 3 // 4, 96 * 1024 * 1024))
    except Exception:
        return 48 * 1024 * 1024


# ---------------------------------------------------------------------------
# One-time setup: row-normalized mean-aggregation matrix A (N_p, N_p), bf16.
# ---------------------------------------------------------------------------
def build_aggregation_matrix(src, tgt, n_p):
    """A[i, j] = (#edges j->i) / max(in_degree(i), 1), built in O(E).

    Built once per forward pass with an XLA scatter-add (the perf review's
    recommended replacement for the previous O(N^2*E) one-hot-matmul Pallas
    builder, which dominated the whole forward).  Returned in bf16 to halve
    the dominant HBM stream of every layer's A @ p_agg contraction.
    """
    # TODO(synk): for very large graphs switch to sorted edges + scalar-
    # prefetched per-node-tile offsets so A never materializes densely.
    src = jnp.asarray(src, jnp.int32)
    tgt = jnp.asarray(tgt, jnp.int32)
    counts = jnp.zeros((n_p, n_p), jnp.float32).at[tgt, src].add(1.0)
    deg = jnp.zeros((n_p, 1), jnp.float32).at[tgt, 0].add(1.0)
    deg = jnp.where(deg == 0.0, 1.0, deg)          # count[count == 0] = 1
    return (counts / deg).astype(jnp.bfloat16)


# ---------------------------------------------------------------------------
# Per-layer projection kernel: p_self = x @ W_self + b,  p_agg = x @ W_agg.
# ---------------------------------------------------------------------------
def _project_kernel(x_ref, ws_ref, wa_ref, b_ref, pself_ref, pagg_ref):
    x = x_ref[...]
    pself_ref[...] = (jnp.dot(x, ws_ref[...],
                              preferred_element_type=jnp.float32)
                      + b_ref[...])
    pagg_ref[...] = jnp.dot(x, wa_ref[...],
                            preferred_element_type=jnp.float32
                            ).astype(pagg_ref.dtype)


# ---------------------------------------------------------------------------
# Per-layer aggregation kernel: out = normalize(relu(A @ p_agg + p_self)).
# ---------------------------------------------------------------------------
def _make_layer_kernel(cout, cout_p):
    inv_sqrt_cout = 1.0 / math.sqrt(cout)

    def kernel(a_ref, pagg_ref, pself_ref, out_ref, acc_ref):
        k = pl.program_id(1)

        @pl.when(k == 0)
        def _():
            acc_ref[...] = jnp.zeros_like(acc_ref)

        # mean aggregation fused with the "agg" half of the linear layer.
        acc_ref[...] += jnp.dot(a_ref[...], pagg_ref[...],
                                preferred_element_type=jnp.float32)

        @pl.when(k == pl.num_programs(1) - 1)
        def _():
            h = jnp.maximum(acc_ref[...] + pself_ref[...], 0.0)   # ReLU

            # uhg_normalize followed by normalize_points collapses to a single
            # L2 row-normalization of the non-negative features:
            #   f = h * rsqrt(sum(h^2))  (the clamp'd uhg scale cancels), and
            # the appended homogeneous coordinate is sign(1)*1 = 1.  All-zero
            # rows follow the reference's ones-then-L2-normalize fallback.
            sumsq = jnp.sum(h * h, axis=-1, keepdims=True)   # one XLU reduce
            inv = lax.rsqrt(jnp.where(sumsq == 0.0, 1.0, sumsq))   # EUP rsqrt
            col = lax.broadcasted_iota(jnp.int32, (1, cout_p), 1)
            out_ref[...] = jnp.where(
                col == cout, 1.0,
                jnp.where(sumsq == 0.0,
                          jnp.where(col < cout, inv_sqrt_cout, 0.0),
                          h * inv)).astype(out_ref.dtype)   # lane-dense store

    return kernel


def uhg_sage_layer(a, x_pad, weight, bias, cin, out_dtype=jnp.bfloat16):
    """One UHGSAGEConv(cin, cout, append_uhg=True) on padded bf16 operands.

    a:      (N_p, N_p) bf16 row-normalized aggregation matrix
    x_pad:  (N_p, Cin_p) bf16, real features in columns [:cin]
    weight: (cout, 2*cin), bias: (cout,)
    returns (N_p, Cout_p) out_dtype with real output in columns [:cout+1]
    """
    n_p, cin_p = x_pad.shape
    cout = weight.shape[0]
    assert weight.shape[1] == 2 * cin
    cout_p = _round_up(cout + 1, LANE)
    vmem_limit = _vmem_limit_bytes()

    # Pre-split / pad the linear weight into self- and agg-halves (bf16).
    w = jnp.asarray(weight, jnp.float32)
    w_self = (jnp.zeros((cin_p, cout_p), jnp.float32)
              .at[:cin, :cout].set(w[:, :cin].T).astype(jnp.bfloat16))
    w_agg = (jnp.zeros((cin_p, cout_p), jnp.float32)
             .at[:cin, :cout].set(w[:, cin:].T).astype(jnp.bfloat16))
    b = jnp.zeros((1, cout_p), jnp.float32).at[0, :cout].set(
        jnp.asarray(bias, jnp.float32))

    # --- projection: p_self = x @ W_self + b (f32), p_agg = x @ W_agg (bf16)
    tp = _pick_tile(n_p, TN_PREF)
    p_self, p_agg = pl.pallas_call(
        _project_kernel,
        out_shape=(jax.ShapeDtypeStruct((n_p, cout_p), jnp.float32),
                   jax.ShapeDtypeStruct((n_p, cout_p), jnp.bfloat16)),
        grid_spec=pltpu.PrefetchScalarGridSpec(
            num_scalar_prefetch=0,
            grid=(n_p // tp,),
            in_specs=[
                pl.BlockSpec((tp, cin_p), lambda i: (i, 0)),       # x rows
                pl.BlockSpec((cin_p, cout_p), lambda i: (0, 0)),   # w_self
                pl.BlockSpec((cin_p, cout_p), lambda i: (0, 0)),   # w_agg
                pl.BlockSpec((1, cout_p), lambda i: (0, 0)),       # bias
            ],
            out_specs=(pl.BlockSpec((tp, cout_p), lambda i: (i, 0)),
                       pl.BlockSpec((tp, cout_p), lambda i: (i, 0))),
        ),
        compiler_params=pltpu.CompilerParams(
            dimension_semantics=("parallel",),
            vmem_limit_bytes=vmem_limit),
    )(x_pad, w_self, w_agg, b)

    # --- aggregation + epilogue: out = normalize(relu(A @ p_agg + p_self))
    tn = _pick_tile(n_p, TN_PREF)
    tk = _pick_tile(n_p, TK_PREF)
    grid = (n_p // tn, n_p // tk)
    kernel = _make_layer_kernel(cout, cout_p)

    flops = 2 * n_p * n_p * cout_p + 8 * n_p * cout_p
    bytes_accessed = (2 * n_p * n_p                      # A stream (bf16)
                      + 2 * n_p * cout_p * grid[0]       # p_agg re-streams
                      + 4 * n_p * cout_p                 # p_self
                      + jnp.dtype(out_dtype).itemsize * n_p * cout_p)

    return pl.pallas_call(
        kernel,
        out_shape=jax.ShapeDtypeStruct((n_p, cout_p), out_dtype),
        grid_spec=pltpu.PrefetchScalarGridSpec(
            num_scalar_prefetch=0,
            grid=grid,
            in_specs=[
                pl.BlockSpec((tn, tk), lambda i, k: (i, k)),        # A tile
                pl.BlockSpec((tk, cout_p), lambda i, k: (k, 0)),    # p_agg rows
                pl.BlockSpec((tn, cout_p), lambda i, k: (i, 0)),    # p_self rows
            ],
            out_specs=pl.BlockSpec((tn, cout_p), lambda i, k: (i, 0)),
            scratch_shapes=[pltpu.VMEM((tn, cout_p), jnp.float32)],
        ),
        compiler_params=pltpu.CompilerParams(
            # node-tile axis parallel (shards across v7x's 2 TCs; harmless on
            # v5e/v6e).  Reduction axis last, "arbitrary".
            dimension_semantics=("parallel", "arbitrary"),
            vmem_limit_bytes=vmem_limit),
        cost_estimate=pl.CostEstimate(
            flops=int(flops), transcendentals=int(n_p),
            bytes_accessed=int(bytes_accessed)),
    )(a, p_agg, p_self)


# ---------------------------------------------------------------------------
# Model init + forward
# ---------------------------------------------------------------------------
def init_uhg_linear(key, out_c, in_c_times2):
    # TODO(synk): PyTorch uses nn.init.orthogonal_ before row-normalizing;
    # here we use a normal init followed by the same unit-row-norm step.
    w = jax.random.normal(key, (out_c, in_c_times2), jnp.float32)
    w = w / jnp.clip(jnp.linalg.norm(w, axis=1, keepdims=True), 1e-8, None)
    b = jnp.zeros((out_c,), jnp.float32)
    return w, b


def init_uhg_model(key, in_channels, hidden_channels, out_channels, num_layers=2):
    keys = jax.random.split(key, num_layers)
    params = [init_uhg_linear(keys[0], hidden_channels, in_channels * 2)]
    for i in range(num_layers - 2):
        params.append(init_uhg_linear(keys[1 + i], hidden_channels,
                                      (hidden_channels + 1) * 2))
    params.append(init_uhg_linear(keys[-1], out_channels,
                                  (hidden_channels + 1) * 2))
    return params


def uhg_model_forward(x, edge_index, params):
    n, cin = x.shape
    n_p = _round_up(n, LANE)
    cin_p = _round_up(cin, LANE)
    x_pad = jnp.zeros((n_p, cin_p), jnp.bfloat16).at[:n, :cin].set(
        jnp.asarray(x, jnp.bfloat16))
    # Graph structure is identical across layers: build A once, reuse it.
    a = build_aggregation_matrix(edge_index[0], edge_index[1], n_p)
    num_layers = len(params)
    for li, (w, b) in enumerate(params):
        # Intermediate layers feed the next layer's bf16 matmuls directly;
        # the final layer is emitted in f32.
        out_dtype = jnp.float32 if li == num_layers - 1 else jnp.bfloat16
        x_pad = uhg_sage_layer(a, x_pad, w, b, cin, out_dtype=out_dtype)
        cin = w.shape[0] + 1      # next layer consumes cout + homogeneous coord
    return x_pad[:n, :cin]


# ---------------- pure-JAX f32 reference (for verification) ----------------
def _reference_layer(x, src, tgt, w, b):
    n = x.shape[0]
    src_feats = x[src]
    agg_sum = jnp.zeros((n, x.shape[1]), jnp.float32).at[tgt].add(src_feats)
    count = jnp.zeros((n, 1), jnp.float32).at[tgt].add(1.0)
    count = jnp.where(count == 0.0, 1.0, count)
    agg = agg_sum / count
    h = jnp.concatenate([x, agg], axis=1) @ w.T + b
    h = jnp.maximum(h, 0.0)
    uhg_n = jnp.sum(h * h, axis=-1, keepdims=True) - 1.0
    f = h / jnp.sqrt(jnp.clip(uhg_n, 1e-8, None))
    zero = jnp.all(f == 0.0, axis=-1, keepdims=True)
    f = jnp.where(zero, jnp.ones_like(f), f)
    f = f / jnp.clip(jnp.sqrt(jnp.sum(f * f, axis=-1, keepdims=True)), 1e-8, None)
    return jnp.concatenate([f, jnp.ones((n, 1), jnp.float32)], axis=1)


def _reference_forward(x, edge_index, params):
    src, tgt = edge_index[0], edge_index[1]
    for w, b in params:
        x = _reference_layer(x, src, tgt, w, b)
    return x


if __name__ == "__main__":
    key = jax.random.PRNGKey(0)
    k_x, k_e, k_p = jax.random.split(key, 3)

    # small graph: 8 nodes, 16 edges, in=8, hidden=16, out=8
    N, E = 8, 16
    in_channels, hidden_channels, out_channels = 8, 16, 8

    x = jax.random.normal(k_x, (N, in_channels), jnp.float32)
    edge_index = jax.random.randint(k_e, (2, E), 0, N, jnp.int32)

    params = init_uhg_model(k_p, in_channels, hidden_channels, out_channels,
                            num_layers=2)

    out = jax.block_until_ready(uhg_model_forward(x, edge_index, params))
    ref = jax.block_until_ready(_reference_forward(x, edge_index, params))

    assert out.shape == (N, out_channels + 1), out.shape
    max_err = float(jnp.max(jnp.abs(out - ref)))
    # bf16 MXU inputs (per the perf review) -> loosened tolerance vs f32 ref.
    assert jnp.allclose(out, ref, rtol=5e-2, atol=5e-2), max_err

    print("KERNEL_OK")
</pallas_src>

<mosaic_0001>
module attributes {stable_mosaic.version = 11 : i64} {
  func.func @_project_kernel(%arg0: i32, %arg1: memref<128x128xbf16, #tpu.memory_space<vmem>>, %arg2: memref<128x128xbf16, #tpu.memory_space<vmem>>, %arg3: memref<128x128xbf16, #tpu.memory_space<vmem>>, %arg4: memref<1x128xf32, #tpu.memory_space<vmem>>, %arg5: memref<128x128xf32, #tpu.memory_space<vmem>>, %arg6: memref<128x128xbf16, #tpu.memory_space<vmem>>) attributes {dimension_semantics = [#tpu.dimension_semantics<parallel>], iteration_bounds = array<i64: 1>, scalar_prefetch = 0 : i64, scratch_operands = 0 : i64, tpu.core_type = #tpu.core_type<tc>, window_params = [{transform_indices = @transform_0, window_bounds = array<i64: 128, 128>}, {pipeline_mode = #tpu.pipeline_mode<synchronous>, transform_indices = @transform_1, window_bounds = array<i64: 128, 128>}, {pipeline_mode = #tpu.pipeline_mode<synchronous>, transform_indices = @transform_2, window_bounds = array<i64: 128, 128>}, {pipeline_mode = #tpu.pipeline_mode<synchronous>, transform_indices = @transform_3, window_bounds = array<i64: 1, 128>}, {transform_indices = @transform_4, window_bounds = array<i64: 128, 128>}, {transform_indices = @transform_5, window_bounds = array<i64: 128, 128>}]} {
    %c0 = arith.constant 0 : index
    %c0_0 = arith.constant 0 : index
    %0 = vector.load %arg1[%c0, %c0_0] : memref<128x128xbf16, #tpu.memory_space<vmem>>, vector<128x128xbf16>
    %c0_1 = arith.constant 0 : index
    %c0_2 = arith.constant 0 : index
    %1 = vector.load %arg2[%c0_1, %c0_2] : memref<128x128xbf16, #tpu.memory_space<vmem>>, vector<128x128xbf16>
    %cst = arith.constant dense<0.000000e+00> : vector<128x128xf32>
    %2 = tpu.matmul %0, %1, %cst {dimension_numbers = #tpu.dot_dimension_numbers<[1], [0], [0], [1], [0, 0, 1, 1], [], []>} : vector<128x128xbf16>, vector<128x128xbf16>, vector<128x128xf32> -> vector<128x128xf32>
    %c0_3 = arith.constant 0 : index
    %c0_4 = arith.constant 0 : index
    %3 = vector.load %arg4[%c0_3, %c0_4] : memref<1x128xf32, #tpu.memory_space<vmem>>, vector<1x128xf32>
    %4 = vector.broadcast %3 : vector<1x128xf32> to vector<128x128xf32>
    %5 = arith.addf %2, %4 : vector<128x128xf32>
    %c0_5 = arith.constant 0 : index
    %c0_6 = arith.constant 0 : index
    %6 = vector.load %arg5[%c0_5, %c0_6] : memref<128x128xf32, #tpu.memory_space<vmem>>, vector<128x128xf32>
    tpu.vector_store %arg5[%c0_5, %c0_6], %5 {strides = array<i32>} : memref<128x128xf32, #tpu.memory_space<vmem>>, vector<128x128xf32>,
    %c0_7 = arith.constant 0 : index
    %c0_8 = arith.constant 0 : index
    %7 = vector.load %arg3[%c0_7, %c0_8] : memref<128x128xbf16, #tpu.memory_space<vmem>>, vector<128x128xbf16>
    %cst_9 = arith.constant dense<0.000000e+00> : vector<128x128xf32>
    %8 = tpu.matmul %0, %7, %cst_9 {dimension_numbers = #tpu.dot_dimension_numbers<[1], [0], [0], [1], [0, 0, 1, 1], [], []>} : vector<128x128xbf16>, vector<128x128xbf16>, vector<128x128xf32> -> vector<128x128xf32>
    %9 = arith.truncf %8 : vector<128x128xf32> to vector<128x128xbf16>
    %c0_10 = arith.constant 0 : index
    %c0_11 = arith.constant 0 : index
    %10 = vector.load %arg6[%c0_10, %c0_11] : memref<128x128xbf16, #tpu.memory_space<vmem>>, vector<128x128xbf16>
    tpu.vector_store %arg6[%c0_10, %c0_11], %9 {strides = array<i32>} : memref<128x128xbf16, #tpu.memory_space<vmem>>, vector<128x128xbf16>,
    return
  }
  func.func @transform_0(%arg0: i32) -> (i32, i32) {
    %c0_i32 = arith.constant 0 : i32
    %c0_i32_0 = arith.constant 0 : i32
    return %arg0, %c0_i32 : i32, i32
  }
  func.func @transform_1(%arg0: i32) -> (i32, i32) {
    %c0_i32 = arith.constant 0 : i32
    %c0_i32_0 = arith.constant 0 : i32
    %c0_i32_1 = arith.constant 0 : i32
    return %c0_i32, %c0_i32_0 : i32, i32
  }
  func.func @transform_2(%arg0: i32) -> (i32, i32) {
    %c0_i32 = arith.constant 0 : i32
    %c0_i32_0 = arith.constant 0 : i32
    %c0_i32_1 = arith.constant 0 : i32
    return %c0_i32, %c0_i32_0 : i32, i32
  }
  func.func @transform_3(%arg0: i32) -> (i32, i32) {
    %c0_i32 = arith.constant 0 : i32
    %c0_i32_0 = arith.constant 0 : i32
    %c0_i32_1 = arith.constant 0 : i32
    return %c0_i32, %c0_i32_0 : i32, i32
  }
  func.func @transform_4(%arg0: i32) -> (i32, i32) {
    %c0_i32 = arith.constant 0 : i32
    %c0_i32_0 = arith.constant 0 : i32
    return %arg0, %c0_i32 : i32, i32
  }
  func.func @transform_5(%arg0: i32) -> (i32, i32) {
    %c0_i32 = arith.constant 0 : i32
    %c0_i32_0 = arith.constant 0 : i32
    return %arg0, %c0_i32 : i32, i32
  }
}

</mosaic_0001>

<llo_original>
// kernel: tpu_custom_call.1
$region0: #{tpu_custom_call.1}
  #allocation0 [shape = 'u32[]', space=smem, size = 0x4, offset = 0x4, fixed_abs, tag = 'smem constant byte address 0x4 - core index']
  #allocation1 [shape = 'u32[144,128]{1,0:T(1,128)}', space=vmem, size = 0x12000, scoped, tag = 'internal scratch']
  %s0 = inlined_call_operand.hbm [shape: bf16[128,128], index: 0, kind: input, shape index: {}]
  %s1 = inlined_call_operand.hbm [shape: bf16[128,128], index: 1, kind: input, shape index: {}]
  %s2 = inlined_call_operand.hbm [shape: bf16[128,128], index: 2, kind: input, shape index: {}]
  %s3 = inlined_call_operand.vmem [shape: f32[1,128], index: 3, kind: input, shape index: {}]
  %s4 = inlined_call_operand.hbm [shape: f32[128,128], index: 4, kind: output, shape index: {0}]
  %s5 = inlined_call_operand.hbm [shape: bf16[128,128], index: 5, kind: output, shape index: {1}]
  %6 = xla_tuple %s4, %s5
  %s7 = sld [smem:[#allocation0]]
  $region46: #{tpu_custom_call.1} parent=0
    _
  %s9 = ssub.s32 1, %s7
  %s10 = scalar_select 0, %s9, %s7
  $region1: #{tpu_custom_call.1} parent=0
    #allocation2 [shape = 'u8[32768]{0}', space=vmem, size = 0x8000, scoped, tag = 'input window, operand 0, single buffered']
    #allocation3 [shape = 's32[1]{0}', space=sflag, size = 0x4, scoped, tag = 'scoped memory for tpu_custom_call.1']
    #allocation4 [shape = 's32[1]{0}', space=sflag, size = 0x4, scoped, tag = 'scoped memory for tpu_custom_call.1']
    #allocation5 [shape = 'u8[32768]{0}', space=vmem, size = 0x8000, scoped, tag = 'input window, operand 1, single buffered']
    #allocation6 [shape = 's32[1]{0}', space=sflag, size = 0x4, scoped, tag = 'scoped memory for tpu_custom_call.1']
    #allocation7 [shape = 'u8[32768]{0}', space=vmem, size = 0x8000, scoped, tag = 'input window, operand 2, single buffered']
    #allocation8 [shape = 'u8[65536]{0}', space=vmem, size = 0x10000, scoped, tag = 'output window, operand 0, single buffered']
    #allocation9 [shape = 'u8[32768]{0}', space=vmem, size = 0x8000, scoped, tag = 'output window, operand 1, single buffered']
    #allocation10 [shape = 's32[1]{0}', space=sflag, size = 0x4, scoped, tag = 'scoped memory for tpu_custom_call.1']
    %11 = vsyncpa [#allocation3], 0
    %12 = vsyncpa [#allocation6], 0
    %13 = vsyncpa [#allocation4], 0
    %14 = vsyncpa [#allocation10], 0
    // Predicated region
    $region2: #{tpu_custom_call.1} parent=1 // pred_check
      _
    $region3: #{tpu_custom_call.1} parent=1 // pred_check_branch
      %16 = sbr.rel (0) target = $region5
    $region4: #{tpu_custom_call.1} parent=1 // pred_region
      %s18 = ssub.s32 1024, 1024
      %19 = vsyncadd [#allocation3], %s18
      %s20 = sshll.u32 [#allocation2], 4
      %s21 = int_to_ptr.vmem [resolvable:$true] %s20
      %26 = dma.hbm_to_vmem [thread:$0]  %s0, 1024, %s21, [#allocation3], 64, 64, 4
    $region5: #{tpu_custom_call.1} parent=1 // pred_fallthru
      _
    // Predicated region
    $region6: #{tpu_custom_call.1} parent=1 // pred_check
      _
    $region7: #{tpu_custom_call.1} parent=1 // pred_check_branch
      %28 = sbr.rel (0) target = $region9
    $region8: #{tpu_custom_call.1} parent=1 // pred_region
      %s30 = ssub.s32 1024, 1024
      %31 = vsyncadd [#allocation6], %s30
      %s32 = sshll.u32 [#allocation5], 4
      %s33 = int_to_ptr.vmem [resolvable:$true] %s32
      %38 = dma.hbm_to_vmem [thread:$0]  %s1, 1024, %s33, [#allocation6], 64, 64, 4
    $region9: #{tpu_custom_call.1} parent=1 // pred_fallthru
      _
    // Predicated region
    $region10: #{tpu_custom_call.1} parent=1 // pred_check
      _
    $region11: #{tpu_custom_call.1} parent=1 // pred_check_branch
      %40 = sbr.rel (0) target = $region13
    $region12: #{tpu_custom_call.1} parent=1 // pred_region
      %s42 = ssub.s32 1024, 1024
      %43 = vsyncadd [#allocation6], %s42
      %s44 = sshll.u32 [#allocation7], 4
      %s45 = int_to_ptr.vmem [resolvable:$true] %s44
      %50 = dma.hbm_to_vmem [thread:$0]  %s2, 1024, %s45, [#allocation6], 64, 64, 4
    $region13: #{tpu_custom_call.1} parent=1 // pred_fallthru
      _
    // Predicated region
    $region14: #{tpu_custom_call.1} parent=1 // pred_check
      _
    $region15: #{tpu_custom_call.1} parent=1 // pred_check_branch
      %52 = sbr.rel (0) target = $region17
    $region16: #{tpu_custom_call.1} parent=1 // pred_region
      _
    $region17: #{tpu_custom_call.1} parent=1 // pred_fallthru
      _
    // Predicated region
    $region18: #{tpu_custom_call.1} parent=1 // pred_check
      _
    $region19: #{tpu_custom_call.1} parent=1 // pred_check_branch
      %54 = sbr.rel (0) target = $region21
    $region20: #{tpu_custom_call.1} parent=1 // pred_region
      %55 = dma.done [#allocation3], 1024
    $region21: #{tpu_custom_call.1} parent=1 // pred_fallthru
      _
    // Predicated region
    $region22: #{tpu_custom_call.1} parent=1 // pred_check
      _
    $region23: #{tpu_custom_call.1} parent=1 // pred_check_branch
      %57 = sbr.rel (0) target = $region25
    $region24: #{tpu_custom_call.1} parent=1 // pred_region
      %58 = dma.done [#allocation6], 1024
    $region25: #{tpu_custom_call.1} parent=1 // pred_fallthru
      _
    // Predicated region
    $region26: #{tpu_custom_call.1} parent=1 // pred_check
      _
    $region27: #{tpu_custom_call.1} parent=1 // pred_check_branch
      %60 = sbr.rel (0) target = $region29
    $region28: #{tpu_custom_call.1} parent=1 // pred_region
      %61 = dma.done [#allocation6], 1024
    $region29: #{tpu_custom_call.1} parent=1 // pred_fallthru
      _
    %v63 = vld [vmem:[#allocation2] sm:$0xf]
    %v64 = vld [vmem:[#allocation2 + $0x4] sm:$0xf]
    %v65 = vld [vmem:[#allocation2 + $0x8] sm:$0xf]
    %v66 = vld [vmem:[#allocation2 + $0xc] sm:$0xf]
    %v67 = vld [vmem:[#allocation2 + $0x10] sm:$0xf]
    %v68 = vld [vmem:[#allocation2 + $0x14] sm:$0xf]
    %v69 = vld [vmem:[#allocation2 + $0x18] sm:$0xf]
    %v70 = vld [vmem:[#allocation2 + $0x1c] sm:$0xf]
    %v71 = vld [vmem:[#allocation2 + $0x20] sm:$0xf]
    %v72 = vld [vmem:[#allocation2 + $0x24] sm:$0xf]
    %v73 = vld [vmem:[#allocation2 + $0x28] sm:$0xf]
    %v74 = vld [vmem:[#allocation2 + $0x2c] sm:$0xf]
    %v75 = vld [vmem:[#allocation2 + $0x30] sm:$0xf]
    %v76 = vld [vmem:[#allocation2 + $0x34] sm:$0xf]
    %v77 = vld [vmem:[#allocation2 + $0x38] sm:$0xf]
    %v78 = vld [vmem:[#allocation2 + $0x3c] sm:$0xf]
    %v79 = vld [vmem:[#allocation5] sm:$0xf]
    %v80 = vld [vmem:[#allocation5 + $0x4] sm:$0xf]
    %v81 = vld [vmem:[#allocation5 + $0x8] sm:$0xf]
    %v82 = vld [vmem:[#allocation5 + $0xc] sm:$0xf]
    %v83 = vld [vmem:[#allocation5 + $0x10] sm:$0xf]
    %v84 = vld [vmem:[#allocation5 + $0x14] sm:$0xf]
    %v85 = vld [vmem:[#allocation5 + $0x18] sm:$0xf]
    %v86 = vld [vmem:[#allocation5 + $0x1c] sm:$0xf]
    %v87 = vld [vmem:[#allocation5 + $0x20] sm:$0xf]
    %v88 = vld [vmem:[#allocation5 + $0x24] sm:$0xf]
    %v89 = vld [vmem:[#allocation5 + $0x28] sm:$0xf]
    %v90 = vld [vmem:[#allocation5 + $0x2c] sm:$0xf]
    %v91 = vld [vmem:[#allocation5 + $0x30] sm:$0xf]
    %v92 = vld [vmem:[#allocation5 + $0x34] sm:$0xf]
    %v93 = vld [vmem:[#allocation5 + $0x38] sm:$0xf]
    %v94 = vld [vmem:[#allocation5 + $0x3c] sm:$0xf]
    %v95 = vld [vmem:[%s3] sm:$0x1]
    %v97 = vlaneseq
    %v98 = vshrl.u32 %v97, 7
    %v99 = vsub.s32 0, %v98
    %v100 = vrot.slane %v95, %v99
    %v118 = vunpack.c.l.b16 %v63
    %v119 = vunpack.c.l.b16 %v64
    %v120 = vunpack.c.l.b16 %v65
    %v121 = vunpack.c.l.b16 %v66
    %v122 = vunpack.c.l.b16 %v67
    %v123 = vunpack.c.l.b16 %v68
    %v124 = vunpack.c.l.b16 %v69
    %v125 = vunpack.c.l.b16 %v70
    %v126 = vunpack.c.l.b16 %v71
    %v127 = vunpack.c.l.b16 %v72
    %v128 = vunpack.c.l.b16 %v73
    %v129 = vunpack.c.l.b16 %v74
    %v130 = vunpack.c.l.b16 %v75
    %v131 = vunpack.c.l.b16 %v76
    %v132 = vunpack.c.l.b16 %v77
    %v133 = vunpack.c.l.b16 %v78
    %v134 = vpack.c.b16 %v119, %v118
    %v135 = vpack.c.b16 %v121, %v120
    %v136 = vpack.c.b16 %v123, %v122
    %v137 = vpack.c.b16 %v125, %v124
    %v138 = vpack.c.b16 %v127, %v126
    %v139 = vpack.c.b16 %v129, %v128
    %v140 = vpack.c.b16 %v131, %v130
    %v141 = vpack.c.b16 %v133, %v132
    %v166 = vunpack.c.l.b16 %v79
    %v167 = vunpack.c.l.b16 %v80
    %v168 = vunpack.c.l.b16 %v81
    %v169 = vunpack.c.l.b16 %v82
    %v170 = vunpack.c.l.b16 %v83
    %v171 = vunpack.c.l.b16 %v84
    %v172 = vunpack.c.l.b16 %v85
    %v173 = vunpack.c.l.b16 %v86
    %v174 = vunpack.c.l.b16 %v87
    %v175 = vunpack.c.l.b16 %v88
    %v176 = vunpack.c.l.b16 %v89
    %v177 = vunpack.c.l.b16 %v90
    %v178 = vunpack.c.l.b16 %v91
    %v179 = vunpack.c.l.b16 %v92
    %v180 = vunpack.c.l.b16 %v93
    %v181 = vunpack.c.l.b16 %v94
    %v182 = vpack.c.b16 %v167, %v166
    %v183 = vpack.c.b16 %v169, %v168
    %v184 = vpack.c.b16 %v171, %v170
    %v185 = vpack.c.b16 %v173, %v172
    %v186 = vpack.c.b16 %v175, %v174
    %v187 = vpack.c.b16 %v177, %v176
    %v188 = vpack.c.b16 %v179, %v178
    %v189 = vpack.c.b16 %v181, %v180
    %198 = vmatprep.subr.bf16.mxu0 0
    %199 = vmatpush1.bf16.msra.mxu0 %v182
    %200 = vmatprep.subr.bf16.mxu0 0
    %201 = vmatpush1.bf16.msra.mxu0 %v183
    %202 = vmatprep.subr.bf16.mxu0 0
    %203 = vmatpush1.bf16.msra.mxu0 %v184
    %204 = vmatprep.subr.bf16.mxu0 0
    %205 = vmatpush1.bf16.msra.mxu0 %v185
    %206 = vmatprep.subr.bf16.mxu0 0
    %207 = vmatpush1.bf16.msra.mxu0 %v186
    %208 = vmatprep.subr.bf16.mxu0 0
    %209 = vmatpush1.bf16.msra.mxu0 %v187
    %210 = vmatprep.subr.bf16.mxu0 0
    %211 = vmatpush1.bf16.msra.mxu0 %v188
    %212 = vmatprep.subr.bf16.mxu0 0
    %213 = vmatpush1.bf16.msra.mxu0 %v189
    %214 = vmatprep.subr.bf16.mxu0 0
    %215 = vmatpush1.bf16.msra.mxu0 0
    %216 = vmatprep.subr.bf16.mxu0 0
    %217 = vmatpush1.bf16.msra.mxu0 0
    %218 = vmatprep.subr.bf16.mxu0 0
    %219 = vmatpush1.bf16.msra.mxu0 0
    %220 = vmatprep.subr.bf16.mxu0 0
    %221 = vmatpush1.bf16.msra.mxu0 0
    %222 = vmatprep.subr.bf16.mxu0 0
    %223 = vmatpush1.bf16.msra.mxu0 0
    %224 = vmatprep.subr.bf16.mxu0 0
    %225 = vmatpush1.bf16.msra.mxu0 0
    %226 = vmatprep.subr.bf16.mxu0 0
    %227 = vmatpush1.bf16.msra.mxu0 0
    %228 = vmatprep.subr.bf16.mxu0 0
    %229 = vmatpush1.bf16.msra.mxu0 0
    %230 = vmatprep.mubr.bf16.mxu0 0
    %231 = vmatmul.mubr.bf16.gmra.mrb[0].mxu0 %v134
    %v232 = vpop.f32.mrb[0].mxu0
    %v233 = vadd.f32 %v100, %v232
    %v234 = vpop.f32.mrb[0].mxu0
    %v235 = vpop.f32.mrb[0].mxu0
    %v236 = vadd.f32 %v100, %v235
    %v237 = vpop.f32.mrb[0].mxu0
    %238 = vmatprep.mubr.bf16.mxu0 0
    %239 = vmatmul.mubr.bf16.gmra.mrb[0].mxu0 %v135
    %v240 = vpop.f32.mrb[0].mxu0
    %v241 = vadd.f32 %v100, %v240
    %v242 = vpop.f32.mrb[0].mxu0
    %v243 = vpop.f32.mrb[0].mxu0
    %v244 = vadd.f32 %v100, %v243
    %v245 = vpop.f32.mrb[0].mxu0
    %246 = vmatprep.mubr.bf16.mxu0 0
    %247 = vmatmul.mubr.bf16.gmra.mrb[0].mxu0 %v136
    %v248 = vpop.f32.mrb[0].mxu0
    %v249 = vadd.f32 %v100, %v248
    %v250 = vpop.f32.mrb[0].mxu0
    %v251 = vpop.f32.mrb[0].mxu0
    %v252 = vadd.f32 %v100, %v251
    %v253 = vpop.f32.mrb[0].mxu0
    %254 = vmatprep.mubr.bf16.mxu0 0
    %255 = vmatmul.mubr.bf16.gmra.mrb[0].mxu0 %v137
    %v256 = vpop.f32.mrb[0].mxu0
    %v257 = vadd.f32 %v100, %v256
    %v258 = vpop.f32.mrb[0].mxu0
    %v259 = vpop.f32.mrb[0].mxu0
    %v260 = vadd.f32 %v100, %v259
    %v261 = vpop.f32.mrb[0].mxu0
    %262 = vmatprep.mubr.bf16.mxu0 0
    %263 = vmatmul.mubr.bf16.gmra.mrb[0].mxu0 %v138
    %v264 = vpop.f32.mrb[0].mxu0
    %v265 = vadd.f32 %v100, %v264
    %v266 = vpop.f32.mrb[0].mxu0
    %v267 = vpop.f32.mrb[0].mxu0
    %v268 = vadd.f32 %v100, %v267
    %v269 = vpop.f32.mrb[0].mxu0
    %270 = vmatprep.mubr.bf16.mxu0 0
    %271 = vmatmul.mubr.bf16.gmra.mrb[0].mxu0 %v139
    %v272 = vpop.f32.mrb[0].mxu0
    %v273 = vadd.f32 %v100, %v272
    %v274 = vpop.f32.mrb[0].mxu0
    %v275 = vpop.f32.mrb[0].mxu0
    %v276 = vadd.f32 %v100, %v275
    %v277 = vpop.f32.mrb[0].mxu0
    %278 = vmatprep.mubr.bf16.mxu0 0
    %279 = vmatmul.mubr.bf16.gmra.mrb[0].mxu0 %v140
    %v280 = vpop.f32.mrb[0].mxu0
    %v281 = vadd.f32 %v100, %v280
    %v282 = vpop.f32.mrb[0].mxu0
    %v283 = vpop.f32.mrb[0].mxu0
    %v284 = vadd.f32 %v100, %v283
    %v285 = vpop.f32.mrb[0].mxu0
    %286 = vmatprep.mubr.bf16.mxu0 0
    %287 = vmatmul.mubr.bf16.gmra.mrb[0].mxu0 %v141
    %v288 = vpop.f32.mrb[0].mxu0
    %v289 = vadd.f32 %v100, %v288
    %v290 = vpop.f32.mrb[0].mxu0
    %v291 = vpop.f32.mrb[0].mxu0
    %v292 = vadd.f32 %v100, %v291
    %v293 = vpop.f32.mrb[0].mxu0
    %294 = vdwg.mxu0
    %295 = vst [vmem:[#allocation8] sm:$0xff] %v233
    %296 = vst [vmem:[#allocation8 + $0x8] sm:$0xff] %v236
    %297 = vst [vmem:[#allocation8 + $0x10] sm:$0xff] %v241
    %298 = vst [vmem:[#allocation8 + $0x18] sm:$0xff] %v244
    %299 = vst [vmem:[#allocation8 + $0x20] sm:$0xff] %v249
    %300 = vst [vmem:[#allocation8 + $0x28] sm:$0xff] %v252
    %301 = vst [vmem:[#allocation8 + $0x30] sm:$0xff] %v257
    %302 = vst [vmem:[#allocation8 + $0x38] sm:$0xff] %v260
    %303 = vst [vmem:[#allocation8 + $0x40] sm:$0xff] %v265
    %304 = vst [vmem:[#allocation8 + $0x48] sm:$0xff] %v268
    %305 = vst [vmem:[#allocation8 + $0x50] sm:$0xff] %v273
    %306 = vst [vmem:[#allocation8 + $0x58] sm:$0xff] %v276
    %307 = vst [vmem:[#allocation8 + $0x60] sm:$0xff] %v281
    %308 = vst [vmem:[#allocation8 + $0x68] sm:$0xff] %v284
    %309 = vst [vmem:[#allocation8 + $0x70] sm:$0xff] %v289
    %310 = vst [vmem:[#allocation8 + $0x78] sm:$0xff] %v292
    %v311 = vld [vmem:[#allocation7] sm:$0xf]
    %v312 = vld [vmem:[#allocation7 + $0x4] sm:$0xf]
    %v313 = vld [vmem:[#allocation7 + $0x8] sm:$0xf]
    %v314 = vld [vmem:[#allocation7 + $0xc] sm:$0xf]
    %v315 = vld [vmem:[#allocation7 + $0x10] sm:$0xf]
    %v316 = vld [vmem:[#allocation7 + $0x14] sm:$0xf]
    %v317 = vld [vmem:[#allocation7 + $0x18] sm:$0xf]
    %v318 = vld [vmem:[#allocation7 + $0x1c] sm:$0xf]
    %v319 = vld [vmem:[#allocation7 + $0x20] sm:$0xf]
    %v320 = vld [vmem:[#allocation7 + $0x24] sm:$0xf]
    %v321 = vld [vmem:[#allocation7 + $0x28] sm:$0xf]
    %v322 = vld [vmem:[#allocation7 + $0x2c] sm:$0xf]
    %v323 = vld [vmem:[#allocation7 + $0x30] sm:$0xf]
    %v324 = vld [vmem:[#allocation7 + $0x34] sm:$0xf]
    %v325 = vld [vmem:[#allocation7 + $0x38] sm:$0xf]
    %v326 = vld [vmem:[#allocation7 + $0x3c] sm:$0xf]
    %v343 = vunpack.c.l.b16 %v311
    %v344 = vunpack.c.l.b16 %v312
    %v345 = vunpack.c.l.b16 %v313
    %v346 = vunpack.c.l.b16 %v314
    %v347 = vunpack.c.l.b16 %v315
    %v348 = vunpack.c.l.b16 %v316
    %v349 = vunpack.c.l.b16 %v317
    %v350 = vunpack.c.l.b16 %v318
    %v351 = vunpack.c.l.b16 %v319
    %v352 = vunpack.c.l.b16 %v320
    %v353 = vunpack.c.l.b16 %v321
    %v354 = vunpack.c.l.b16 %v322
    %v355 = vunpack.c.l.b16 %v323
    %v356 = vunpack.c.l.b16 %v324
    %v357 = vunpack.c.l.b16 %v325
    %v358 = vunpack.c.l.b16 %v326
    %v359 = vpack.c.b16 %v344, %v343
    %v360 = vpack.c.b16 %v346, %v345
    %v361 = vpack.c.b16 %v348, %v347
    %v362 = vpack.c.b16 %v350, %v349
    %v363 = vpack.c.b16 %v352, %v351
    %v364 = vpack.c.b16 %v354, %v353
    %v365 = vpack.c.b16 %v356, %v355
    %v366 = vpack.c.b16 %v358, %v357
    %375 = vmatprep.subr.bf16.mxu0 0
    %376 = vmatpush1.bf16.msra.mxu0 %v359
    %377 = vmatprep.subr.bf16.mxu0 0
    %378 = vmatpush1.bf16.msra.mxu0 %v360
    %379 = vmatprep.subr.bf16.mxu0 0
    %380 = vmatpush1.bf16.msra.mxu0 %v361
    %381 = vmatprep.subr.bf16.mxu0 0
    %382 = vmatpush1.bf16.msra.mxu0 %v362
    %383 = vmatprep.subr.bf16.mxu0 0
    %384 = vmatpush1.bf16.msra.mxu0 %v363
    %385 = vmatprep.subr.bf16.mxu0 0
    %386 = vmatpush1.bf16.msra.mxu0 %v364
    %387 = vmatprep.subr.bf16.mxu0 0
    %388 = vmatpush1.bf16.msra.mxu0 %v365
    %389 = vmatprep.subr.bf16.mxu0 0
    %390 = vmatpush1.bf16.msra.mxu0 %v366
    %391 = vmatprep.subr.bf16.mxu0 0
    %392 = vmatpush1.bf16.msra.mxu0 0
    %393 = vmatprep.subr.bf16.mxu0 0
    %394 = vmatpush1.bf16.msra.mxu0 0
    %395 = vmatprep.subr.bf16.mxu0 0
    %396 = vmatpush1.bf16.msra.mxu0 0
    %397 = vmatprep.subr.bf16.mxu0 0
    %398 = vmatpush1.bf16.msra.mxu0 0
    %399 = vmatprep.subr.bf16.mxu0 0
    %400 = vmatpush1.bf16.msra.mxu0 0
    %401 = vmatprep.subr.bf16.mxu0 0
    %402 = vmatpush1.bf16.msra.mxu0 0
    %403 = vmatprep.subr.bf16.mxu0 0
    %404 = vmatpush1.bf16.msra.mxu0 0
    %405 = vmatprep.subr.bf16.mxu0 0
    %406 = vmatpush1.bf16.msra.mxu0 0
    %407 = vmatprep.mubr.bf16.mxu0 0
    %408 = vmatmul.mubr.bf16.gmra.mrb[0].mxu0 %v134
    %v409 = vpop.f32.mrb[0].mxu0
    %v410 = vadd.f32 0.0, %v409
    %v411 = vpop.f32.mrb[0].mxu0
    %v412 = vpop.f32.mrb[0].mxu0
    %v413 = vadd.f32 0.0, %v412
    %v414 = vpop.f32.mrb[0].mxu0
    %415 = vmatprep.mubr.bf16.mxu0 0
    %416 = vmatmul.mubr.bf16.gmra.mrb[0].mxu0 %v135
    %v417 = vpop.f32.mrb[0].mxu0
    %v418 = vadd.f32 0.0, %v417
    %v419 = vpop.f32.mrb[0].mxu0
    %v420 = vpop.f32.mrb[0].mxu0
    %v421 = vadd.f32 0.0, %v420
    %v422 = vpop.f32.mrb[0].mxu0
    %423 = vmatprep.mubr.bf16.mxu0 0
    %424 = vmatmul.mubr.bf16.gmra.mrb[0].mxu0 %v136
    %v425 = vpop.f32.mrb[0].mxu0
    %v426 = vadd.f32 0.0, %v425
    %v427 = vpop.f32.mrb[0].mxu0
    %v428 = vpop.f32.mrb[0].mxu0
    %v429 = vadd.f32 0.0, %v428
    %v430 = vpop.f32.mrb[0].mxu0
    %431 = vmatprep.mubr.bf16.mxu0 0
    %432 = vmatmul.mubr.bf16.gmra.mrb[0].mxu0 %v137
    %v433 = vpop.f32.mrb[0].mxu0
    %v434 = vadd.f32 0.0, %v433
    %v435 = vpop.f32.mrb[0].mxu0
    %v436 = vpop.f32.mrb[0].mxu0
    %v437 = vadd.f32 0.0, %v436
    %v438 = vpop.f32.mrb[0].mxu0
    %439 = vmatprep.mubr.bf16.mxu0 0
    %440 = vmatmul.mubr.bf16.gmra.mrb[0].mxu0 %v138
    %v441 = vpop.f32.mrb[0].mxu0
    %v442 = vadd.f32 0.0, %v441
    %v443 = vpop.f32.mrb[0].mxu0
    %v444 = vpop.f32.mrb[0].mxu0
    %v445 = vadd.f32 0.0, %v444
    %v446 = vpop.f32.mrb[0].mxu0
    %447 = vmatprep.mubr.bf16.mxu0 0
    %448 = vmatmul.mubr.bf16.gmra.mrb[0].mxu0 %v139
    %v449 = vpop.f32.mrb[0].mxu0
    %v450 = vadd.f32 0.0, %v449
    %v451 = vpop.f32.mrb[0].mxu0
    %v452 = vpop.f32.mrb[0].mxu0
    %v453 = vadd.f32 0.0, %v452
    %v454 = vpop.f32.mrb[0].mxu0
    %455 = vmatprep.mubr.bf16.mxu0 0
    %456 = vmatmul.mubr.bf16.gmra.mrb[0].mxu0 %v140
    %v457 = vpop.f32.mrb[0].mxu0
    %v458 = vadd.f32 0.0, %v457
    %v459 = vpop.f32.mrb[0].mxu0
    %v460 = vpop.f32.mrb[0].mxu0
    %v461 = vadd.f32 0.0, %v460
    %v462 = vpop.f32.mrb[0].mxu0
    %463 = vmatprep.mubr.bf16.mxu0 0
    %464 = vmatmul.mubr.bf16.gmra.mrb[0].mxu0 %v141
    %v465 = vpop.f32.mrb[0].mxu0
    %v466 = vadd.f32 0.0, %v465
    %v467 = vpop.f32.mrb[0].mxu0
    %v468 = vpop.f32.mrb[0].mxu0
    %v469 = vadd.f32 0.0, %v468
    %v470 = vpop.f32.mrb[0].mxu0
    %471 = vdwg.mxu0
    %v472 = vpack.c.bf16 %v413, %v410
    %v473 = vpack.c.bf16 %v421, %v418
    %v474 = vpack.c.bf16 %v429, %v426
    %v475 = vpack.c.bf16 %v437, %v434
    %v476 = vpack.c.bf16 %v445, %v442
    %v477 = vpack.c.bf16 %v453, %v450
    %v478 = vpack.c.bf16 %v461, %v458
    %v479 = vpack.c.bf16 %v469, %v466
    %v488 = vunpack.c.l.b16 %v472
    %v489 = vunpack.c.h.b16 %v472
    %v490 = vunpack.c.l.b16 %v473
    %v491 = vunpack.c.h.b16 %v473
    %v492 = vunpack.c.l.b16 %v474
    %v493 = vunpack.c.h.b16 %v474
    %v494 = vunpack.c.l.b16 %v475
    %v495 = vunpack.c.h.b16 %v475
    %v496 = vunpack.c.l.b16 %v476
    %v497 = vunpack.c.h.b16 %v476
    %v498 = vunpack.c.l.b16 %v477
    %v499 = vunpack.c.h.b16 %v477
    %v500 = vunpack.c.l.b16 %v478
    %v501 = vunpack.c.h.b16 %v478
    %v502 = vunpack.c.l.b16 %v479
    %v503 = vunpack.c.h.b16 %v479
    %v504 = vpack.c.b16 %v488, %v488
    %v505 = vpack.c.b16 %v489, %v489
    %v506 = vpack.c.b16 %v490, %v490
    %v507 = vpack.c.b16 %v491, %v491
    %v508 = vpack.c.b16 %v492, %v492
    %v509 = vpack.c.b16 %v493, %v493
    %v510 = vpack.c.b16 %v494, %v494
    %v511 = vpack.c.b16 %v495, %v495
    %v512 = vpack.c.b16 %v496, %v496
    %v513 = vpack.c.b16 %v497, %v497
    %v514 = vpack.c.b16 %v498, %v498
    %v515 = vpack.c.b16 %v499, %v499
    %v516 = vpack.c.b16 %v500, %v500
    %v517 = vpack.c.b16 %v501, %v501
    %v518 = vpack.c.b16 %v502, %v502
    %v519 = vpack.c.b16 %v503, %v503
    %536 = vst [vmem:[#allocation9] sm:$0xf] %v504
    %537 = vst [vmem:[#allocation9 + $0x4] sm:$0xf] %v505
    %538 = vst [vmem:[#allocation9 + $0x8] sm:$0xf] %v506
    %539 = vst [vmem:[#allocation9 + $0xc] sm:$0xf] %v507
    %540 = vst [vmem:[#allocation9 + $0x10] sm:$0xf] %v508
    %541 = vst [vmem:[#allocation9 + $0x14] sm:$0xf] %v509
    %542 = vst [vmem:[#allocation9 + $0x18] sm:$0xf] %v510
    %543 = vst [vmem:[#allocation9 + $0x1c] sm:$0xf] %v511
    %544 = vst [vmem:[#allocation9 + $0x20] sm:$0xf] %v512
    %545 = vst [vmem:[#allocation9 + $0x24] sm:$0xf] %v513
    %546 = vst [vmem:[#allocation9 + $0x28] sm:$0xf] %v514
    %547 = vst [vmem:[#allocation9 + $0x2c] sm:$0xf] %v515
    %548 = vst [vmem:[#allocation9 + $0x30] sm:$0xf] %v516
    %549 = vst [vmem:[#allocation9 + $0x34] sm:$0xf] %v517
    %550 = vst [vmem:[#allocation9 + $0x38] sm:$0xf] %v518
    %551 = vst [vmem:[#allocation9 + $0x3c] sm:$0xf] %v519
    // Predicated region
    $region30: #{tpu_custom_call.1} parent=1 // pred_check
      _
    $region31: #{tpu_custom_call.1} parent=1 // pred_check_branch
      %553 = sbr.rel (0) target = $region33
    $region32: #{tpu_custom_call.1} parent=1 // pred_region
      %s555 = ssub.s32 2048, 2048
      %556 = vsyncadd [#allocation4], %s555
      %s557 = sshll.u32 [#allocation8], 4
      %s558 = int_to_ptr.vmem [resolvable:$true] %s557
      %563 = dma.vmem_to_hbm [thread:$0]  %s558, 2048, %s4, [#allocation4], 128, 128, 8
    $region33: #{tpu_custom_call.1} parent=1 // pred_fallthru
      _
    // Predicated region
    $region34: #{tpu_custom_call.1} parent=1 // pred_check
      _
    $region35: #{tpu_custom_call.1} parent=1 // pred_check_branch
      %565 = sbr.rel (0) target = $region37
    $region36: #{tpu_custom_call.1} parent=1 // pred_region
      %s567 = ssub.s32 1024, 1024
      %568 = vsyncadd [#allocation10], %s567
      %s569 = sshll.u32 [#allocation9], 4
      %s570 = int_to_ptr.vmem [resolvable:$true] %s569
      %575 = dma.vmem_to_hbm [thread:$0]  %s570, 1024, %s5, [#allocation10], 64, 64, 4
    $region37: #{tpu_custom_call.1} parent=1 // pred_fallthru
      _
    // Predicated region
    $region38: #{tpu_custom_call.1} parent=1 // pred_check
      _
    $region39: #{tpu_custom_call.1} parent=1 // pred_check_branch
      %577 = sbr.rel (0) target = $region41
    $region40: #{tpu_custom_call.1} parent=1 // pred_region
      %578 = dma.done [#allocation4], 2048
    $region41: #{tpu_custom_call.1} parent=1 // pred_fallthru
      _
    // Predicated region
    $region42: #{tpu_custom_call.1} parent=1 // pred_check
      _
    $region43: #{tpu_custom_call.1} parent=1 // pred_check_branch
      %580 = sbr.rel (0) target = $region45
    $region44: #{tpu_custom_call.1} parent=1 // pred_region
      %581 = dma.done [#allocation10], 1024
    $region45: #{tpu_custom_call.1} parent=1 // pred_fallthru
      _
    %582 = vsyncpa [#allocation3], 1
    %583 = vsyncpa [#allocation6], 1
    %584 = vsyncpa [#allocation4], 1
    %585 = vsyncpa [#allocation10], 1

</llo_original>
